<compile_context>
chip_gen: v7x
topology: tpu7x:2x2x1
jax: 0.10.0
libtpu: 0.0.40
codegen_flags: <defaults>
</compile_context>

<pallas_src>
import jax
import jax.numpy as jnp
from jax.experimental import pallas as pl
from jax.experimental.pallas import tpu as pltpu


def _mlp_kernel(params_ref, x_ref, o_ref):
    # params_ref (SMEM, f32[17]) layout:
    #   [0:8]   w1 row-major:  w1[0, 0..3], w1[1, 0..3]
    #   [8:12]  b1
    #   [12:16] w2[:, 0]
    #   [16]    b2
    # x_ref:  VMEM (2, TB)  feature-major batch tile (batch on lanes)
    # o_ref:  VMEM (1, TB)  lane-dense output tile
    x0 = x_ref[0:1, :]                        # (1, TB)
    x1 = x_ref[1:2, :]                        # (1, TB)

    z = jnp.full_like(x0, 0.0) + params_ref[16]   # start from fc2 bias
    for j in range(4):                        # statically unrolled: 4 hidden units
        h = params_ref[j] * x0 + params_ref[4 + j] * x1 + params_ref[8 + j]
        h = jnp.maximum(h, 0.0)               # ReLU        (VPU)
        z = z + params_ref[12 + j] * h        # fc2 accum   (VPU)

    o_ref[...] = jax.nn.sigmoid(z).astype(o_ref.dtype)   # sigmoid on EUP slot


def simple_nn_forward(x, w1, b1, w2, b2, *, tile_b=8192):
    """x: [B, 2] f32; w1: [2, 4]; b1: [4]; w2: [4, 1]; b2: [1] -> [B, 1] f32."""
    B = x.shape[0]
    assert x.shape[1] == 2

    # Lane-dense tiling of the batch: tile is a multiple of 128; batch padded to
    # a whole number of tiles (the tail is dropped by the final slice).
    lanes = 128
    n_lane_blocks = pl.cdiv(B, lanes)
    tb = min(max(1, tile_b // lanes), n_lane_blocks) * lanes
    num_tiles = pl.cdiv(n_lane_blocks * lanes, tb)
    B_pad = num_tiles * tb

    # Feature-major, padded input: [2, B_pad] (transpose+pad fuse into one XLA op).
    x_t = jnp.pad(jnp.transpose(x.astype(jnp.float32)), ((0, 0), (0, B_pad - B)))

    # Pack all 17 parameters into one SMEM scalar array.
    params = jnp.concatenate(
        [w1.reshape(-1), b1.reshape(-1), w2.reshape(-1), b2.reshape(-1)]
    ).astype(jnp.float32)

    out = pl.pallas_call(
        _mlp_kernel,
        out_shape=jax.ShapeDtypeStruct((1, B_pad), jnp.float32),
        grid=(num_tiles,),
        in_specs=[
            pl.BlockSpec(memory_space=pltpu.MemorySpace.SMEM),   # params (scalars)
            pl.BlockSpec((2, tb), lambda i: (0, i)),             # x tile, batch on lanes
        ],
        out_specs=pl.BlockSpec((1, tb), lambda i: (0, i)),       # lane-dense output
        compiler_params=pltpu.CompilerParams(
            dimension_semantics=("parallel",)),                  # shard batch across TCs
    )(params, x_t)

    # Back to PyTorch-style [B, 1].
    return out[0, :B].reshape(B, 1)


def _reference_forward(x, w1, b1, w2, b2):
    h = jnp.maximum(x @ w1 + b1, 0.0)
    return jax.nn.sigmoid(h @ w2 + b2)


if __name__ == "__main__":
    key = jax.random.PRNGKey(0)
    kx1, kx2, kw1, kb1, kw2, kb2 = jax.random.split(key, 6)

    # Deterministic parameter init (PyTorch-Linear-like uniform bounds).
    bound1 = 1.0 / (2 ** 0.5)   # fan_in = 2
    bound2 = 1.0 / (4 ** 0.5)   # fan_in = 4
    w1 = jax.random.uniform(kw1, (2, 4), jnp.float32, -bound1, bound1)
    b1 = jax.random.uniform(kb1, (4,), jnp.float32, -bound1, bound1)
    w2 = jax.random.uniform(kw2, (4, 1), jnp.float32, -bound2, bound2)
    b2 = jax.random.uniform(kb2, (1,), jnp.float32, -bound2, bound2)

    # Small batch (original spec scale): single 128-lane tile, tail padded/masked.
    x_small = jax.random.normal(kx1, (8, 2), jnp.float32)
    out_small = jax.block_until_ready(simple_nn_forward(x_small, w1, b1, w2, b2))
    ref_small = _reference_forward(x_small, w1, b1, w2, b2)
    assert out_small.shape == (8, 1)
    assert jnp.allclose(out_small, ref_small, atol=1e-5, rtol=1e-5)

    # Non-multiple-of-128 batch with a forced small tile to exercise the
    # multi-step pipelined grid + tail-padding path.
    x_big = jax.random.normal(kx2, (300, 2), jnp.float32)
    out_big = jax.block_until_ready(
        simple_nn_forward(x_big, w1, b1, w2, b2, tile_b=128))
    ref_big = _reference_forward(x_big, w1, b1, w2, b2)
    assert out_big.shape == (300, 1)
    assert jnp.allclose(out_big, ref_big, atol=1e-5, rtol=1e-5)

    print("KERNEL_OK")
</pallas_src>

<mosaic_0001>
module attributes {stable_mosaic.version = 11 : i64} {
  func.func @_mlp_kernel(%arg0: i32, %arg1: memref<17xf32, #tpu.memory_space<smem>>, %arg2: memref<2x128xf32, #tpu.memory_space<vmem>>, %arg3: memref<1x128xf32, #tpu.memory_space<vmem>>) attributes {dimension_semantics = [#tpu.dimension_semantics<parallel>], iteration_bounds = array<i64: 1>, scalar_prefetch = 0 : i64, scratch_operands = 0 : i64, tpu.core_type = #tpu.core_type<tc>, window_params = [{transform_indices = @transform_0, window_bounds = array<i64: 17>}, {transform_indices = @transform_1, window_bounds = array<i64: 2, 128>}, {transform_indices = @transform_2, window_bounds = array<i64: 1, 128>}]} {
    %c0 = arith.constant 0 : index
    %c0_0 = arith.constant 0 : index
    %0 = vector.load %arg2[%c0, %c0_0] : memref<2x128xf32, #tpu.memory_space<vmem>>, vector<1x128xf32>
    %c1 = arith.constant 1 : index
    %c0_1 = arith.constant 0 : index
    %1 = vector.load %arg2[%c1, %c0_1] : memref<2x128xf32, #tpu.memory_space<vmem>>, vector<1x128xf32>
    %cst = arith.constant 0.000000e+00 : f32
    %2 = vector.broadcast %cst : f32 to vector<1x128xf32>
    %c16 = arith.constant 16 : index
    %3 = memref.load %arg1[%c16] : memref<17xf32, #tpu.memory_space<smem>>
    %4 = vector.broadcast %3 : f32 to vector<1x128xf32>
    %5 = arith.addf %2, %4 : vector<1x128xf32>
    %c0_2 = arith.constant 0 : index
    %6 = memref.load %arg1[%c0_2] : memref<17xf32, #tpu.memory_space<smem>>
    %7 = vector.broadcast %6 : f32 to vector<1x128xf32>
    %8 = arith.mulf %7, %0 : vector<1x128xf32>
    %c4 = arith.constant 4 : index
    %9 = memref.load %arg1[%c4] : memref<17xf32, #tpu.memory_space<smem>>
    %10 = vector.broadcast %9 : f32 to vector<1x128xf32>
    %11 = arith.mulf %10, %1 : vector<1x128xf32>
    %12 = arith.addf %8, %11 : vector<1x128xf32>
    %c8 = arith.constant 8 : index
    %13 = memref.load %arg1[%c8] : memref<17xf32, #tpu.memory_space<smem>>
    %14 = vector.broadcast %13 : f32 to vector<1x128xf32>
    %15 = arith.addf %12, %14 : vector<1x128xf32>
    %cst_3 = arith.constant 0.000000e+00 : f32
    %16 = vector.broadcast %cst_3 : f32 to vector<1x128xf32>
    %17 = arith.maximumf %15, %16 : vector<1x128xf32>
    %c12 = arith.constant 12 : index
    %18 = memref.load %arg1[%c12] : memref<17xf32, #tpu.memory_space<smem>>
    %19 = vector.broadcast %18 : f32 to vector<1x128xf32>
    %20 = arith.mulf %19, %17 : vector<1x128xf32>
    %21 = arith.addf %5, %20 : vector<1x128xf32>
    %c1_4 = arith.constant 1 : index
    %22 = memref.load %arg1[%c1_4] : memref<17xf32, #tpu.memory_space<smem>>
    %23 = vector.broadcast %22 : f32 to vector<1x128xf32>
    %24 = arith.mulf %23, %0 : vector<1x128xf32>
    %c5 = arith.constant 5 : index
    %25 = memref.load %arg1[%c5] : memref<17xf32, #tpu.memory_space<smem>>
    %26 = vector.broadcast %25 : f32 to vector<1x128xf32>
    %27 = arith.mulf %26, %1 : vector<1x128xf32>
    %28 = arith.addf %24, %27 : vector<1x128xf32>
    %c9 = arith.constant 9 : index
    %29 = memref.load %arg1[%c9] : memref<17xf32, #tpu.memory_space<smem>>
    %30 = vector.broadcast %29 : f32 to vector<1x128xf32>
    %31 = arith.addf %28, %30 : vector<1x128xf32>
    %cst_5 = arith.constant 0.000000e+00 : f32
    %32 = vector.broadcast %cst_5 : f32 to vector<1x128xf32>
    %33 = arith.maximumf %31, %32 : vector<1x128xf32>
    %c13 = arith.constant 13 : index
    %34 = memref.load %arg1[%c13] : memref<17xf32, #tpu.memory_space<smem>>
    %35 = vector.broadcast %34 : f32 to vector<1x128xf32>
    %36 = arith.mulf %35, %33 : vector<1x128xf32>
    %37 = arith.addf %21, %36 : vector<1x128xf32>
    %c2 = arith.constant 2 : index
    %38 = memref.load %arg1[%c2] : memref<17xf32, #tpu.memory_space<smem>>
    %39 = vector.broadcast %38 : f32 to vector<1x128xf32>
    %40 = arith.mulf %39, %0 : vector<1x128xf32>
    %c6 = arith.constant 6 : index
    %41 = memref.load %arg1[%c6] : memref<17xf32, #tpu.memory_space<smem>>
    %42 = vector.broadcast %41 : f32 to vector<1x128xf32>
    %43 = arith.mulf %42, %1 : vector<1x128xf32>
    %44 = arith.addf %40, %43 : vector<1x128xf32>
    %c10 = arith.constant 10 : index
    %45 = memref.load %arg1[%c10] : memref<17xf32, #tpu.memory_space<smem>>
    %46 = vector.broadcast %45 : f32 to vector<1x128xf32>
    %47 = arith.addf %44, %46 : vector<1x128xf32>
    %cst_6 = arith.constant 0.000000e+00 : f32
    %48 = vector.broadcast %cst_6 : f32 to vector<1x128xf32>
    %49 = arith.maximumf %47, %48 : vector<1x128xf32>
    %c14 = arith.constant 14 : index
    %50 = memref.load %arg1[%c14] : memref<17xf32, #tpu.memory_space<smem>>
    %51 = vector.broadcast %50 : f32 to vector<1x128xf32>
    %52 = arith.mulf %51, %49 : vector<1x128xf32>
    %53 = arith.addf %37, %52 : vector<1x128xf32>
    %c3 = arith.constant 3 : index
    %54 = memref.load %arg1[%c3] : memref<17xf32, #tpu.memory_space<smem>>
    %55 = vector.broadcast %54 : f32 to vector<1x128xf32>
    %56 = arith.mulf %55, %0 : vector<1x128xf32>
    %c7 = arith.constant 7 : index
    %57 = memref.load %arg1[%c7] : memref<17xf32, #tpu.memory_space<smem>>
    %58 = vector.broadcast %57 : f32 to vector<1x128xf32>
    %59 = arith.mulf %58, %1 : vector<1x128xf32>
    %60 = arith.addf %56, %59 : vector<1x128xf32>
    %c11 = arith.constant 11 : index
    %61 = memref.load %arg1[%c11] : memref<17xf32, #tpu.memory_space<smem>>
    %62 = vector.broadcast %61 : f32 to vector<1x128xf32>
    %63 = arith.addf %60, %62 : vector<1x128xf32>
    %cst_7 = arith.constant 0.000000e+00 : f32
    %64 = vector.broadcast %cst_7 : f32 to vector<1x128xf32>
    %65 = arith.maximumf %63, %64 : vector<1x128xf32>
    %c15 = arith.constant 15 : index
    %66 = memref.load %arg1[%c15] : memref<17xf32, #tpu.memory_space<smem>>
    %67 = vector.broadcast %66 : f32 to vector<1x128xf32>
    %68 = arith.mulf %67, %65 : vector<1x128xf32>
    %69 = arith.addf %53, %68 : vector<1x128xf32>
    %70 = arith.negf %69 : vector<1x128xf32>
    %71 = math.exp %70 : vector<1x128xf32>
    %cst_8 = arith.constant 1.000000e+00 : f32
    %72 = vector.broadcast %cst_8 : f32 to vector<1x128xf32>
    %73 = arith.addf %72, %71 : vector<1x128xf32>
    %74 = arith.divf %72, %73 : vector<1x128xf32>
    %c0_9 = arith.constant 0 : index
    %c0_10 = arith.constant 0 : index
    %75 = vector.load %arg3[%c0_9, %c0_10] : memref<1x128xf32, #tpu.memory_space<vmem>>, vector<1x128xf32>
    tpu.vector_store %arg3[%c0_9, %c0_10], %74 {strides = array<i32>} : memref<1x128xf32, #tpu.memory_space<vmem>>, vector<1x128xf32>,
    return
  }
  func.func @transform_0(%arg0: i32) -> i32 {
    %c0_i32 = arith.constant 0 : i32
    %c0_i32_0 = arith.constant 0 : i32
    return %c0_i32 : i32
  }
  func.func @transform_1(%arg0: i32) -> (i32, i32) {
    %c0_i32 = arith.constant 0 : i32
    %c0_i32_0 = arith.constant 0 : i32
    return %c0_i32, %arg0 : i32, i32
  }
  func.func @transform_2(%arg0: i32) -> (i32, i32) {
    %c0_i32 = arith.constant 0 : i32
    %c0_i32_0 = arith.constant 0 : i32
    return %c0_i32, %arg0 : i32, i32
  }
}

</mosaic_0001>

<llo_original>
// kernel: tpu_custom_call.1
$region0: #{tpu_custom_call.1}
  #allocation0 [shape = 'u32[]', space=smem, size = 0x4, offset = 0x4, fixed_abs, tag = 'smem constant byte address 0x4 - core index']
  #allocation1 [shape = 'u32[144,128]{1,0:T(1,128)}', space=vmem, size = 0x12000, scoped, tag = 'internal scratch']
  %s0 = inlined_call_operand.hbm [shape: f32[17], index: 0, kind: input, shape index: {}]
  %s1 = inlined_call_operand.vmem [shape: f32[2,128], index: 1, kind: input, shape index: {}]
  %s2 = inlined_call_operand.hbm [shape: f32[1,128], index: 2, kind: output, shape index: {}]
  %s3 = sld [smem:[#allocation0]]
  $region22: #{tpu_custom_call.1} parent=0
    _
  %s5 = ssub.s32 1, %s3
  %s6 = scalar_select 0, %s5, %s3
  $region1: #{tpu_custom_call.1} parent=0
    #allocation2 [shape = 'u8[512]{0}', space=smem, size = 0x200, scoped, tag = 'input window, operand 0, single buffered']
    #allocation3 [shape = 's32[1]{0}', space=sflag, size = 0x4, scoped, tag = 'scoped memory for tpu_custom_call.1']
    #allocation4 [shape = 's32[1]{0}', space=sflag, size = 0x4, scoped, tag = 'scoped memory for tpu_custom_call.1']
    #allocation5 [shape = 'u8[512]{0}', space=vmem, size = 0x400, scoped, tag = 'output window, operand 0, single buffered']
    %7 = vsyncpa [#allocation4], 0
    %8 = vsyncpa [#allocation3], 0
    // Predicated region
    $region2: #{tpu_custom_call.1} parent=1 // pred_check
      _
    $region3: #{tpu_custom_call.1} parent=1 // pred_check_branch
      %10 = sbr.rel (0) target = $region5
    $region4: #{tpu_custom_call.1} parent=1 // pred_region
      %s12 = ssub.s32 16, 16
      %13 = vsyncadd [#allocation4], %s12
      %16 = dma.hbm_to_smem %s0, 16, [#allocation2], [#allocation4]
    $region5: #{tpu_custom_call.1} parent=1 // pred_fallthru
      _
    // Predicated region
    $region6: #{tpu_custom_call.1} parent=1 // pred_check
      _
    $region7: #{tpu_custom_call.1} parent=1 // pred_check_branch
      %18 = sbr.rel (0) target = $region9
    $region8: #{tpu_custom_call.1} parent=1 // pred_region
      _
    $region9: #{tpu_custom_call.1} parent=1 // pred_fallthru
      _
    // Predicated region
    $region10: #{tpu_custom_call.1} parent=1 // pred_check
      _
    $region11: #{tpu_custom_call.1} parent=1 // pred_check_branch
      %20 = sbr.rel (0) target = $region13
    $region12: #{tpu_custom_call.1} parent=1 // pred_region
      %21 = dma.done [#allocation4], 16
    $region13: #{tpu_custom_call.1} parent=1 // pred_fallthru
      _
    %22 = sfence
    %v23 = vld [vmem:[%s1] sm:$0x1]
    %v24 = vld [vmem:[%s1 + $0x1] sm:$0x1]
    %s25 = sld [smem:[#allocation2 + $0x10]]
    %v26 = vstv %s25
    %v27 = vadd.f32 %v26, 0.0
    %s28 = sld [smem:[#allocation2]]
    %v29 = vstv %s28
    %v30 = vmul.f32 %v29, %v23
    %s31 = sld [smem:[#allocation2 + $0x4]]
    %v32 = vstv %s31
    %v33 = vmul.f32 %v32, %v24
    %v34 = vadd.f32 %v30, %v33
    %s35 = sld [smem:[#allocation2 + $0x8]]
    %v36 = vstv %s35
    %v37 = vadd.f32 %v34, %v36
    %v38 = vmax.f32 %v37, 0.0
    %s39 = sld [smem:[#allocation2 + $0xc]]
    %v40 = vstv %s39
    %v41 = vmul.f32 %v40, %v38
    %v42 = vadd.f32 %v27, %v41
    %s43 = sld [smem:[#allocation2 + $0x1]]
    %v44 = vstv %s43
    %v45 = vmul.f32 %v44, %v23
    %s46 = sld [smem:[#allocation2 + $0x5]]
    %v47 = vstv %s46
    %v48 = vmul.f32 %v47, %v24
    %v49 = vadd.f32 %v45, %v48
    %s50 = sld [smem:[#allocation2 + $0x9]]
    %v51 = vstv %s50
    %v52 = vadd.f32 %v49, %v51
    %v53 = vmax.f32 %v52, 0.0
    %s54 = sld [smem:[#allocation2 + $0xd]]
    %v55 = vstv %s54
    %v56 = vmul.f32 %v55, %v53
    %v57 = vadd.f32 %v42, %v56
    %s58 = sld [smem:[#allocation2 + $0x2]]
    %v59 = vstv %s58
    %v60 = vmul.f32 %v59, %v23
    %s61 = sld [smem:[#allocation2 + $0x6]]
    %v62 = vstv %s61
    %v63 = vmul.f32 %v62, %v24
    %v64 = vadd.f32 %v60, %v63
    %s65 = sld [smem:[#allocation2 + $0xa]]
    %v66 = vstv %s65
    %v67 = vadd.f32 %v64, %v66
    %v68 = vmax.f32 %v67, 0.0
    %s69 = sld [smem:[#allocation2 + $0xe]]
    %v70 = vstv %s69
    %v71 = vmul.f32 %v70, %v68
    %v72 = vadd.f32 %v57, %v71
    %s73 = sld [smem:[#allocation2 + $0x3]]
    %v74 = vstv %s73
    %v75 = vmul.f32 %v74, %v23
    %s76 = sld [smem:[#allocation2 + $0x7]]
    %v77 = vstv %s76
    %v78 = vmul.f32 %v77, %v24
    %v79 = vadd.f32 %v75, %v78
    %s80 = sld [smem:[#allocation2 + $0xb]]
    %v81 = vstv %s80
    %v82 = vadd.f32 %v79, %v81
    %v83 = vmax.f32 %v82, 0.0
    %s84 = sld [smem:[#allocation2 + $0xf]]
    %v85 = vstv %s84
    %v86 = vmul.f32 %v85, %v83
    %v87 = vadd.f32 %v72, %v86
    %v88 = vxor.u32 %v87, 2147483648
    %v89 = vmul.f32 %v88, 1.442695
    %v90 = vpow.pop %v89
    %v91 = vadd.f32 %v90, 1.0
    %v92 = vrcp.pop %v91
    %v93 = vmul.f32 1.0, %v92
    %94 = vst [vmem:[#allocation5] sm:$0x1] %v93
    // Predicated region
    $region14: #{tpu_custom_call.1} parent=1 // pred_check
      _
    $region15: #{tpu_custom_call.1} parent=1 // pred_check_branch
      %96 = sbr.rel (0) target = $region17
    $region16: #{tpu_custom_call.1} parent=1 // pred_region
      %s98 = ssub.s32 16, 16
      %99 = vsyncadd [#allocation3], %s98
      %s101 = sshll.u32 [#allocation5], 4
      %s102 = int_to_ptr.vmem [resolvable:$true] %s101
      %104 = dma.vmem_to_hbm [thread:$0]  %s102, 16, %s2, [#allocation3]
    $region17: #{tpu_custom_call.1} parent=1 // pred_fallthru
      _
    // Predicated region
    $region18: #{tpu_custom_call.1} parent=1 // pred_check
      _
    $region19: #{tpu_custom_call.1} parent=1 // pred_check_branch
      %106 = sbr.rel (0) target = $region21
    $region20: #{tpu_custom_call.1} parent=1 // pred_region
      %107 = dma.done [#allocation3], 16
    $region21: #{tpu_custom_call.1} parent=1 // pred_fallthru
      _
    %108 = vsyncpa [#allocation3], 1
    %109 = vsyncpa [#allocation4], 1

</llo_original>
